<compile_context>
chip_gen: v6e
topology: v6e:2x2x1
jax: 0.10.0
libtpu: 0.0.40
codegen_flags: <defaults>
</compile_context>

<pallas_src>
import functools

import jax
import jax.numpy as jnp
from jax.experimental import pallas as pl
from jax.experimental.pallas import tpu as pltpu


def _round_up(x: int, m: int) -> int:
    return ((x + m - 1) // m) * m


def _vmem_budget():
    """(tile byte budget, vmem_limit_bytes) from detected VMEM capacity."""
    cap = 64 * 1024 * 1024                     # conservative fallback: v7x per-TC
    try:
        cap = int(pltpu.get_tpu_info().vmem_capacity_bytes)
    except Exception:
        pass
    if cap <= 0:
        cap = 64 * 1024 * 1024
    # Double-buffered working set budget; keep clear headroom inside the
    # scoped VMEM limit we request below.
    tile_budget = max(4 * 1024 * 1024, min(40 * 1024 * 1024, cap // 3))
    vmem_limit = min((cap * 3) // 4, tile_budget + 16 * 1024 * 1024)
    vmem_limit = max(vmem_limit, tile_budget + 4 * 1024 * 1024)
    return tile_budget, vmem_limit


def _pick_tile_rows(rows: int, d: int, in_bytes: int, time_bytes: int,
                    mult: int, budget: int) -> int:
    """Largest row-tile fitting the double-buffered VMEM budget (lane-padded)."""
    lane = 128
    recon_row = _round_up(d, lane) * in_bytes        # lane-padded VMEM bytes/row
    time_row = lane * max(4, time_bytes)             # (tm, 1) pads to a vreg row
    bytes_per_row = 2 * recon_row + 2 * time_row     # x2: double buffering
    tm = max(mult, budget // bytes_per_row)
    tm = min(tm, _round_up(rows, mult))
    return max(mult, (tm // mult) * mult)


def _tile_partial_sum(recon_ref, time_ref, *, tile_row0, acc_rows, n_chunks,
                      valid_rows=None):
    """Sum of squared errors of one (TM, D) tile, folded to (acc_rows, D).

    Static chunk loop: the partial sum stays register-resident (~<=16 vregs),
    so the hot loop is load -> sub -> mul -> add with no accumulator VMEM
    traffic.
    """
    part = None
    for c in range(n_chunks):
        r0 = c * acc_rows
        r = recon_ref[r0:r0 + acc_rows, :].astype(jnp.float32)   # (acc_rows, D)
        t = time_ref[r0:r0 + acc_rows, :].astype(jnp.float32)    # (acc_rows, 1)
        diff = r - t                                             # == time.unsqueeze(2)
        sq = diff * diff
        if valid_rows is not None:
            rows = (tile_row0 + r0
                    + jax.lax.broadcasted_iota(jnp.int32, sq.shape, 0))
            sq = jnp.where(rows < valid_rows, sq, 0.0)
        part = sq if part is None else part + sq
    return part


def _time_loss_kernel(*refs, tile_rows, acc_rows, valid_rows, scale, has_beta,
                      mask_last):
    if has_beta:
        beta_ref, recon_ref, time_ref, out_ref, acc_ref = refs
    else:
        recon_ref, time_ref, out_ref, acc_ref = refs
        beta_ref = None

    i = pl.program_id(0)
    last = pl.num_programs(0) - 1
    n_chunks = tile_rows // acc_rows
    tile_row0 = i * tile_rows

    # Zero the small vector accumulator at the start of the reduction.
    @pl.when(i == 0)
    def _():
        acc_ref[...] = jnp.zeros_like(acc_ref)

    if mask_last:
        # Steady state: no masking work at all (keeps v7x HBM-bound).
        @pl.when(i < last)
        def _():
            acc_ref[...] += _tile_partial_sum(
                recon_ref, time_ref, tile_row0=tile_row0,
                acc_rows=acc_rows, n_chunks=n_chunks)

        # Final (ragged) tile: mask rows past the logical end.
        @pl.when(i == last)
        def _():
            acc_ref[...] += _tile_partial_sum(
                recon_ref, time_ref, tile_row0=tile_row0,
                acc_rows=acc_rows, n_chunks=n_chunks, valid_rows=valid_rows)
    else:
        acc_ref[...] += _tile_partial_sum(
            recon_ref, time_ref, tile_row0=tile_row0,
            acc_rows=acc_rows, n_chunks=n_chunks)

    # Single cross-lane reduction + mean + beta scale, once, at the end.
    @pl.when(i == last)
    def _():
        total = jnp.sum(acc_ref[...])
        if has_beta:
            out_ref[0, 0] = beta_ref[0, 0] * (total * scale)
        else:
            out_ref[0, 0] = total * scale


def time_loss(recon_time: jax.Array, time: jax.Array, beta, *,
              tile_rows: int | None = None) -> jax.Array:
    """beta * mean((recon_time - time[:, :, None])**2)  (== TimeLoss.forward)."""
    assert recon_time.ndim == 3 and time.ndim == 2
    assert recon_time.shape[:2] == time.shape

    b, s, d = recon_time.shape
    rows = b * s
    n_elems = rows * d

    # Contiguous (=> free) reshapes; time broadcasts along lanes in-kernel.
    recon2d = recon_time.reshape(rows, d)
    time2d = time.reshape(rows, 1)

    in_bytes = recon_time.dtype.itemsize
    mult = max(8, 32 // in_bytes)                    # sublane packing: 8/16/32

    tile_budget, vmem_limit = _vmem_budget()
    if tile_rows is None:
        tm = _pick_tile_rows(rows, d, in_bytes, time.dtype.itemsize, mult,
                             tile_budget)
    else:
        tm = max(mult, (int(tile_rows) // mult) * mult)
        tm = min(tm, _round_up(rows, mult))

    # Register-resident partial-sum height: ~<=16 live vregs, pack-aligned.
    lane_vregs = _round_up(d, 128) // 128
    acc_rows = max(mult, ((128 // lane_vregs) // mult) * mult)
    acc_rows = min(acc_rows, tm)
    tm = max(acc_rows, (tm // acc_rows) * acc_rows)

    grid_steps = pl.cdiv(rows, tm)
    mask_last = (grid_steps * tm) != rows

    beta_is_static = isinstance(beta, (bool, int, float)) and not isinstance(
        beta, jax.Array)
    scale = (float(beta) if beta_is_static else 1.0) / float(n_elems)

    kernel = functools.partial(
        _time_loss_kernel,
        tile_rows=tm, acc_rows=acc_rows, valid_rows=rows, scale=scale,
        has_beta=not beta_is_static, mask_last=mask_last)

    in_specs = [
        pl.BlockSpec((tm, d), lambda i: (i, 0)),     # recon row tiles
        pl.BlockSpec((tm, 1), lambda i: (i, 0)),     # time row tiles (lane bcast)
    ]
    args = [recon2d, time2d]
    if not beta_is_static:
        in_specs.insert(0, pl.BlockSpec(memory_space=pltpu.MemorySpace.SMEM))
        args.insert(0, jnp.asarray(beta, jnp.float32).reshape(1, 1))

    cost = pl.CostEstimate(
        flops=3 * n_elems,                           # sub, mul, add per element
        transcendentals=0,
        bytes_accessed=(recon2d.size * in_bytes
                        + time2d.size * time.dtype.itemsize + 4))

    out = pl.pallas_call(
        kernel,
        out_shape=jax.ShapeDtypeStruct((1, 1), jnp.float32),
        grid=(grid_steps,),
        in_specs=in_specs,
        out_specs=pl.BlockSpec(memory_space=pltpu.MemorySpace.SMEM),
        scratch_shapes=[pltpu.VMEM((acc_rows, d), jnp.float32)],
        compiler_params=pltpu.CompilerParams(
            dimension_semantics=("arbitrary",),      # sequential reduction axis
            vmem_limit_bytes=int(vmem_limit)),
        cost_estimate=cost,
    )(*args)
    return out[0, 0]


if __name__ == "__main__":
    key = jax.random.PRNGKey(0)
    k1, k2, k3, k4, k5, k6 = jax.random.split(key, 6)

    def ref_loss(recon, t, beta_val):
        rf = recon.astype(jnp.float32)
        tf = t.astype(jnp.float32)[:, :, None]
        return jnp.asarray(beta_val, jnp.float32) * jnp.mean((rf - tf) ** 2)

    # Case 1: small single-tile shape, static Python beta (folded into scale).
    B, S, D = 2, 8, 32
    recon_a = jax.random.normal(k1, (B, S, D), dtype=jnp.float32)
    time_a = jax.random.normal(k2, (B, S), dtype=jnp.float32)
    out_a = jax.block_until_ready(time_loss(recon_a, time_a, 0.5))
    ref_a = ref_loss(recon_a, time_a, 0.5)
    assert jnp.allclose(out_a, ref_a, rtol=1e-5, atol=1e-6), (out_a, ref_a)

    # Case 2: multi-tile grid with a ragged remainder tile (exercises the
    # pl.when init/finalize accumulator and last-step-only masking).
    B, S, D = 2, 100, 32          # 200 rows, tile_rows=64 -> 4 steps, last partial
    recon_b = jax.random.normal(k3, (B, S, D), dtype=jnp.float32)
    time_b = jax.random.normal(k4, (B, S), dtype=jnp.float32)
    out_b = jax.block_until_ready(time_loss(recon_b, time_b, 0.5, tile_rows=64))
    ref_b = ref_loss(recon_b, time_b, 0.5)
    assert jnp.allclose(out_b, ref_b, rtol=1e-5, atol=1e-6), (out_b, ref_b)

    # Case 3: feature dim not dividing 128 + traced beta (SMEM scalar path).
    B, S, D = 2, 8, 48
    recon_c = jax.random.normal(k5, (B, S, D), dtype=jnp.float32)
    time_c = jax.random.normal(k6, (B, S), dtype=jnp.float32)
    beta_c = jnp.asarray(0.25, jnp.float32)
    out_c = jax.block_until_ready(time_loss(recon_c, time_c, beta_c))
    ref_c = ref_loss(recon_c, time_c, beta_c)
    assert jnp.allclose(out_c, ref_c, rtol=1e-5, atol=1e-6), (out_c, ref_c)

    print("KERNEL_OK")
</pallas_src>

<mosaic_0001>
module attributes {stable_mosaic.version = 11 : i64} {
  func.func @_time_loss_kernel(%arg0: i32, %arg1: memref<16x32xf32, #tpu.memory_space<vmem>>, %arg2: memref<16x1xf32, #tpu.memory_space<vmem>>, %arg3: memref<1x1xf32, #tpu.memory_space<smem>>, %arg4: memref<16x32xf32, #tpu.memory_space<vmem>>) attributes {dimension_semantics = [#tpu.dimension_semantics<arbitrary>], iteration_bounds = array<i64: 1>, scalar_prefetch = 0 : i64, scratch_operands = 1 : i64, tpu.core_type = #tpu.core_type<tc>, window_params = [{transform_indices = @transform_0, window_bounds = array<i64: 16, 32>}, {transform_indices = @transform_1, window_bounds = array<i64: 16, 1>}, {transform_indices = @transform_2, window_bounds = array<i64: 1, 1>}]} {
    %c0_i32 = arith.constant 0 : i32
    %0 = arith.cmpi eq, %arg0, %c0_i32 : i32
    %1 = arith.extui %0 : i1 to i32
    %c0_i32_0 = arith.constant 0 : i32
    %2 = arith.cmpi ne, %1, %c0_i32_0 : i32
    scf.if %2 {
      %cst = arith.constant 0.000000e+00 : f32
      %14 = vector.broadcast %cst : f32 to vector<16x32xf32>
      %c0_10 = arith.constant 0 : index
      %c0_11 = arith.constant 0 : index
      %15 = vector.load %arg4[%c0_10, %c0_11] : memref<16x32xf32, #tpu.memory_space<vmem>>, vector<16x32xf32>
      tpu.vector_store %arg4[%c0_10, %c0_11], %14 {strides = array<i32>} : memref<16x32xf32, #tpu.memory_space<vmem>>, vector<16x32xf32>,
    } else {
    }
    %c0 = arith.constant 0 : index
    %c0_1 = arith.constant 0 : index
    %3 = vector.load %arg4[%c0, %c0_1] : memref<16x32xf32, #tpu.memory_space<vmem>>, vector<16x32xf32>
    %c0_2 = arith.constant 0 : index
    %c0_3 = arith.constant 0 : index
    %4 = vector.load %arg1[%c0_2, %c0_3] : memref<16x32xf32, #tpu.memory_space<vmem>>, vector<16x32xf32>
    %c0_4 = arith.constant 0 : index
    %c0_5 = arith.constant 0 : index
    %5 = vector.load %arg2[%c0_4, %c0_5] : memref<16x1xf32, #tpu.memory_space<vmem>>, vector<16x1xf32>
    %6 = vector.broadcast %5 : vector<16x1xf32> to vector<16x32xf32>
    %7 = arith.subf %4, %6 : vector<16x32xf32>
    %8 = arith.mulf %7, %7 : vector<16x32xf32>
    %9 = arith.addf %3, %8 : vector<16x32xf32>
    %c0_6 = arith.constant 0 : index
    %c0_7 = arith.constant 0 : index
    %10 = vector.load %arg4[%c0_6, %c0_7] : memref<16x32xf32, #tpu.memory_space<vmem>>, vector<16x32xf32>
    tpu.vector_store %arg4[%c0_6, %c0_7], %9 {strides = array<i32>} : memref<16x32xf32, #tpu.memory_space<vmem>>, vector<16x32xf32>,
    %c0_i32_8 = arith.constant 0 : i32
    %11 = arith.cmpi eq, %arg0, %c0_i32_8 : i32
    %12 = arith.extui %11 : i1 to i32
    %c0_i32_9 = arith.constant 0 : i32
    %13 = arith.cmpi ne, %12, %c0_i32_9 : i32
    scf.if %13 {
      %c0_10 = arith.constant 0 : index
      %c0_11 = arith.constant 0 : index
      %14 = vector.load %arg4[%c0_10, %c0_11] : memref<16x32xf32, #tpu.memory_space<vmem>>, vector<16x32xf32>
      %15 = vector.shape_cast %14 : vector<16x32xf32> to vector<1x16x32xf32>
      %cst = arith.constant dense<0.000000e+00> : vector<1xf32>
      %16 = vector.multi_reduction <add>, %15, %cst [1, 2] : vector<1x16x32xf32> to vector<1xf32>
      %17 = vector.shape_cast %16 : vector<1xf32> to vector<1x1x1xf32>
      %18 = vector.extract %17[0, 0, 0] : f32 from vector<1x1x1xf32>
      %cst_12 = arith.constant 9.765625E-4 : f32
      %19 = arith.mulf %18, %cst_12 : f32
      %c0_13 = arith.constant 0 : index
      %c0_14 = arith.constant 0 : index
      %20 = memref.load %arg3[%c0_13, %c0_14] : memref<1x1xf32, #tpu.memory_space<smem>>
      memref.store %19, %arg3[%c0_13, %c0_14] : memref<1x1xf32, #tpu.memory_space<smem>>
    } else {
    }
    return
  }
  func.func @transform_0(%arg0: i32) -> (i32, i32) {
    %c0_i32 = arith.constant 0 : i32
    %c0_i32_0 = arith.constant 0 : i32
    return %arg0, %c0_i32 : i32, i32
  }
  func.func @transform_1(%arg0: i32) -> (i32, i32) {
    %c0_i32 = arith.constant 0 : i32
    %c0_i32_0 = arith.constant 0 : i32
    return %arg0, %c0_i32 : i32, i32
  }
  func.func @transform_2(%arg0: i32) -> (i32, i32) {
    %c0_i32 = arith.constant 0 : i32
    %c0_i32_0 = arith.constant 0 : i32
    %c0_i32_1 = arith.constant 0 : i32
    return %c0_i32, %c0_i32_0 : i32, i32
  }
}

</mosaic_0001>

<llo_original>
// kernel: tpu_custom_call.1
$region0: #{tpu_custom_call.1}
  #allocation0 [shape = 'u32[]', space=smem, size = 0x4, offset = 0x4, fixed_abs, tag = 'smem constant byte address 0x4 - core index']
  #allocation1 [shape = 'u32[144,128]{1,0:T(1,128)}', space=vmem, size = 0x12000, scoped, tag = 'internal scratch']
  #allocation2 [shape = 'f32[16,32]{1,0:T(8,128)}', space=vmem, size = 0x2000, scoped, tag = 'scratch operand']
  %s0 = inlined_call_operand.vmem [shape: f32[16,32], index: 0, kind: input, shape index: {}]
  %s1 = inlined_call_operand.vmem [shape: f32[16,1], index: 1, kind: input, shape index: {}]
  %s2 = inlined_call_operand.hbm [shape: f32[1,1], index: 2, kind: output, shape index: {}]
  %s3 = sld [smem:[#allocation0]]
  $region26: #{tpu_custom_call.1} parent=0
    _
  %s5 = ssub.s32 1, %s3
  %s6 = scalar_select 0, %s5, %s3
  $region1: #{tpu_custom_call.1} parent=0
    #allocation3 [shape = 'u8[512]{0}', space=smem, size = 0x200, scoped, tag = 'output window, operand 0, single buffered']
    #allocation4 [shape = 's32[1]{0}', space=sflag, size = 0x4, scoped, tag = 'scoped memory for tpu_custom_call.1']
    %7 = vsyncpa [#allocation4], 0
    // Predicated region
    $region2: #{tpu_custom_call.1} parent=1 // pred_check
      _
    $region3: #{tpu_custom_call.1} parent=1 // pred_check_branch
      %9 = sbr.rel (0) target = $region5
    $region4: #{tpu_custom_call.1} parent=1 // pred_region
      _
    $region5: #{tpu_custom_call.1} parent=1 // pred_fallthru
      _
    // Predicated region
    $region6: #{tpu_custom_call.1} parent=1 // pred_check
      _
    $region7: #{tpu_custom_call.1} parent=1 // pred_check_branch
      %11 = sbr.rel (0) target = $region9
    $region8: #{tpu_custom_call.1} parent=1 // pred_region
      _
    $region9: #{tpu_custom_call.1} parent=1 // pred_fallthru
      _
    %p12 = scmp.eq.s32.totalorder 0, 0
    // Predicated region
    $region10: #{tpu_custom_call.1} parent=1 // pred_check
      %p13 = pneg %p12
    $region11: #{tpu_custom_call.1} parent=1 // pred_check_branch
      %15 = sbr.rel (%p13) target = $region13
    $region12: #{tpu_custom_call.1} parent=1 // pred_region
      %vm16 = vcmask 261120
      %17 = vst.msk [vmem:[#allocation2] sm:$0xff] %vm16, 0.0
      %18 = vst.msk [vmem:[#allocation2 + $0x8] sm:$0xff] %vm16, 0.0
    $region13: #{tpu_custom_call.1} parent=1 // pred_fallthru
      _
    %v19 = vld [vmem:[#allocation2] sm:$0xff]
    %v20 = vld [vmem:[#allocation2 + $0x8] sm:$0xff]
    %v21 = vld [vmem:[%s0] sm:$0xff]
    %v22 = vld [vmem:[%s0 + $0x8] sm:$0xff]
    %v23 = vld [vmem:[%s1] sm:$0xff]
    %v24 = vld [vmem:[%s1 + $0x8] sm:$0xff]
    %26 = vset.pattern.permute.xlu0 0
    %27 = vperm.xlu0 %26, %v23
    %v28 = vpop.permute.xlu0 %27
    %31 = vset.pattern.permute.xlu0 0
    %32 = vperm.xlu0 %31, %v24
    %v33 = vpop.permute.xlu0 %32
    %v35 = vsub.f32 %v21, %v28
    %v36 = vsub.f32 %v22, %v33
    %v37 = vmul.f32 %v35, %v35
    %v38 = vmul.f32 %v36, %v36
    %v39 = vadd.f32 %v19, %v37
    %v40 = vadd.f32 %v20, %v38
    %vm41 = vcmask 261120
    %42 = vst.msk [vmem:[#allocation2] sm:$0xff] %vm41, %v39
    %43 = vst.msk [vmem:[#allocation2 + $0x8] sm:$0xff] %vm41, %v40
    // Predicated region
    $region14: #{tpu_custom_call.1} parent=1 // pred_check
      %p44 = pneg %p12
    $region15: #{tpu_custom_call.1} parent=1 // pred_check_branch
      %46 = sbr.rel (%p44) target = $region17
    $region16: #{tpu_custom_call.1} parent=1 // pred_region
      %v47 = vld [vmem:[#allocation2] sm:$0xff]
      %v48 = vld [vmem:[#allocation2 + $0x8] sm:$0xff]
      %v49 = vsel %vm41, %v47, 0.0
      %v50 = vsel %vm41, %v48, 0.0
      %v51 = vadd.f32 %v49, %v50
      %52 = vadd.xlane.f32.xlu0 %v51
      %v53 = vpop.xlane.xlu0 %52
      %v54 = vrot.slane %v53, 4
      %v55 = vadd.f32 %v53, %v54
      %v56 = vrot.slane %v55, 2
      %v57 = vadd.f32 %v55, %v56
      %v58 = vrot.slane %v57, 1
      %v59 = vadd.f32 %v57, %v58
      %s60 = vtos %v59
      %s61 = smul.f32 %s60, 0.0009765625
      %s62 = scalar_lea.smem [#allocation3], 0
      %63 = sst [smem:[%s62]] %s61
    $region17: #{tpu_custom_call.1} parent=1 // pred_fallthru
      _
    // Predicated region
    $region18: #{tpu_custom_call.1} parent=1 // pred_check
      _
    $region19: #{tpu_custom_call.1} parent=1 // pred_check_branch
      %65 = sbr.rel (0) target = $region21
    $region20: #{tpu_custom_call.1} parent=1 // pred_region
      %s67 = ssub.s32 16, 16
      %68 = vsyncadd [#allocation4], %s67
      %71 = dma.smem_to_hbm [#allocation3], 16, %s2, [#allocation4]
    $region21: #{tpu_custom_call.1} parent=1 // pred_fallthru
      _
    // Predicated region
    $region22: #{tpu_custom_call.1} parent=1 // pred_check
      _
    $region23: #{tpu_custom_call.1} parent=1 // pred_check_branch
      %73 = sbr.rel (0) target = $region25
    $region24: #{tpu_custom_call.1} parent=1 // pred_region
      %74 = dma.done [#allocation4], 16
    $region25: #{tpu_custom_call.1} parent=1 // pred_fallthru
      _
    %75 = sfence
    %76 = vsyncpa [#allocation4], 1

</llo_original>
